<compile_context>
chip_gen: v7x
topology: tpu7x:2x2x1
jax: 0.10.0
libtpu: 0.0.40
codegen_flags: <defaults>
</compile_context>

<pallas_src>
import jax
import jax.numpy as jnp
from jax import lax
from jax.experimental import pallas as pl
from jax.experimental.pallas import tpu as pltpu


def _round_up(x, m):
    return ((x + m - 1) // m) * m


def _cdiv(a, b):
    return -(-a // b)


def _vmem_capacity_bytes():
    try:
        return int(pltpu.get_tpu_info().vmem_capacity_bytes)
    except Exception:
        return 64 * 1024 * 1024  # conservative fallback (v7x-sized VMEM)


def _has_two_tensorcores():
    # v7x has 2 TensorCores per chip; v5e/v6e have 1.
    try:
        kind = jax.devices()[0].device_kind.lower()
    except Exception:
        return False
    return "v7" in kind


def _focal_loss_kernel(alpha, gamma, n_rows, tile_n, tiles_per_partial):
    alpha = float(alpha)
    gamma = float(gamma)

    def kernel(x_ref, t_ref, o_ref, acc_ref):
        p_idx = pl.program_id(0)   # partial index (one per TensorCore on v7x)
        t_idx = pl.program_id(1)   # batch-tile index within this partial (reduction axis)

        @pl.when(t_idx == 0)
        def _init():
            acc_ref[...] = jnp.zeros_like(acc_ref)
            o_ref[...] = jnp.zeros_like(o_ref)

        x = x_ref[...].astype(jnp.float32)        # (tile_n, C) logits
        t = t_ref[...]                            # (tile_n, 1) int32 targets

        # Numerically stable softmax pieces; the only full-width transcendental is this exp.
        m = jnp.max(x, axis=-1, keepdims=True)                    # (tile_n, 1)
        denom = jnp.sum(jnp.exp(x - m), axis=-1, keepdims=True)   # (tile_n, 1)

        # Target logit via one-hot lane select (no full-width log / pow needed).
        col = lax.broadcasted_iota(jnp.int32, x.shape, 1)
        onehot = (col == t).astype(jnp.float32)                   # (tile_n, C)
        x_t = jnp.sum(onehot * x, axis=-1, keepdims=True)         # (tile_n, 1)

        # Log-space focal loss on the target column only (avoids 0*log(0) NaN hazard).
        logp_t = (x_t - m) - jnp.log(denom)                       # (tile_n, 1), <= 0
        p_t = jnp.exp(logp_t)
        one_minus = 1.0 - p_t
        if gamma == 2.0:
            focus = one_minus * one_minus                         # VALU square, no pow
        elif gamma == 1.0:
            focus = one_minus
        elif gamma == 0.0:
            focus = jnp.ones_like(one_minus)
        else:
            focus = jnp.power(one_minus, gamma)                   # narrow slice only
        loss_rows = alpha * focus * (-logp_t)                     # (tile_n, 1)

        # Mask rows past the true batch size (partial last block / clamped dummy tail
        # tile).  NOTE: uses the logical, UNCLAMPED tile index, not the index_map value.
        g_tile = p_idx * tiles_per_partial + t_idx
        row = g_tile * tile_n + lax.broadcasted_iota(jnp.int32, loss_rows.shape, 0)
        loss_rows = jnp.where(row < n_rows, loss_rows, 0.0)

        # Deferred reduction: pure VALU add into the persistent row accumulator.
        acc_ref[...] = acc_ref[...] + loss_rows

        @pl.when(t_idx == tiles_per_partial - 1)
        def _finalize():
            # Single cross-sublane reduce per partial, broadcast into the (1, 128) chunk.
            o_ref[...] = jnp.zeros_like(o_ref) + jnp.sum(acc_ref[...])

    return kernel


def _choose_tile_n(n, c, itemsize, vmem_limit_bytes):
    cp = _round_up(max(int(c), 1), 128)       # lane-padded class width in VMEM
    # Per-row VMEM footprint estimate:
    #   2x double-buffered logits block          : 2 * cp * itemsize
    #   2x double-buffered lane-padded tgt block : 2 * 128 * 4
    #   1x persistent f32 row accumulator        : 128 * 4
    #   ~6 live full-width f32 elementwise temps (Mosaic does not fully fuse): 6 * cp * 4
    per_row = 2 * cp * itemsize + 2 * 128 * 4 + 128 * 4 + 6 * cp * 4
    budget = int(vmem_limit_bytes * 0.6)
    tile_n = budget // per_row
    tile_n = min(tile_n, 16384, _round_up(n, 8))
    return max(8, (tile_n // 8) * 8)


def focal_loss(inputs, targets, alpha=0.25, gamma=2.0, tile_n=None):
    """inputs: (N, C) float logits; targets: (N,) int class indices. Returns mean focal loss."""
    n, c = inputs.shape
    itemsize = jnp.dtype(inputs.dtype).itemsize

    # Generation-aware scoped-VMEM request: 128 MiB parts (v5e/v6e) get 64 MiB, 64 MiB
    # parts (v7x) stay at the 32 MiB default to avoid OOM/spill.
    vmem_cap = _vmem_capacity_bytes()
    vmem_limit = 64 * 1024 * 1024 if vmem_cap >= 128 * 1024 * 1024 else 32 * 1024 * 1024

    if tile_n is None:
        tile_n = _choose_tile_n(n, c, itemsize, vmem_limit)
    else:
        tile_n = max(8, _round_up(int(tile_n), 8))

    two_cores = _has_two_tensorcores()
    tiles_total = _cdiv(n, tile_n)
    if two_cores and tiles_total >= 2:
        # Keep both TensorCores fed with several grid steps each: shrink the tile rather
        # than starve one core (avoids a 1-vs-2 tile imbalance hiding pipeline fill/drain).
        min_tiles = 8
        if tiles_total < min_tiles:
            shrunk = max(8, _round_up(_cdiv(n, min_tiles), 8))
            if shrunk < tile_n:
                tile_n = shrunk
                tiles_total = _cdiv(n, tile_n)
        num_partials = 2
    else:
        num_partials = 1
    tiles_per_partial = _cdiv(tiles_total, num_partials)

    # No wrapper-side padding: partial / fully-out-of-range tiles are handled by the
    # clamped index_map + in-kernel row mask.
    t2d = targets.astype(jnp.int32).reshape(n, 1)

    last_tile = tiles_total - 1

    def _x_map(p, i):
        return (jnp.minimum(p * tiles_per_partial + i, last_tile), 0)

    out = pl.pallas_call(
        _focal_loss_kernel(alpha, gamma, n, tile_n, tiles_per_partial),
        out_shape=jax.ShapeDtypeStruct((1, num_partials * 128), jnp.float32),
        grid_spec=pltpu.PrefetchScalarGridSpec(
            num_scalar_prefetch=0,
            grid=(num_partials, tiles_per_partial),
            in_specs=[
                # Full class dim per block (legal: last dim == full array dim), batch tiled.
                pl.BlockSpec((tile_n, c), _x_map),
                pl.BlockSpec((tile_n, 1), _x_map),
            ],
            # One lane-dense (1, 128) accumulator chunk per partial; revisited along the
            # "arbitrary" batch-tile axis.
            out_specs=pl.BlockSpec((1, 128), lambda p, i: (0, p)),
            scratch_shapes=[pltpu.VMEM((tile_n, 1), jnp.float32)],
        ),
        compiler_params=pltpu.CompilerParams(
            dimension_semantics=("parallel", "arbitrary"),
            vmem_limit_bytes=vmem_limit,
        ),
    )(inputs, t2d)

    # Every lane of a partial's chunk holds that partial's accumulated sum; take lane 0.
    partial_totals = out.reshape(num_partials, 128)[:, 0]
    return jnp.sum(partial_totals) / jnp.float32(n)


def focal_loss_ref(inputs, targets, alpha=0.25, gamma=2.0):
    p = jax.nn.softmax(inputs, axis=1)
    onehot = jax.nn.one_hot(targets, inputs.shape[1], dtype=jnp.float32)
    ce = -onehot * jnp.log(p)
    focal = alpha * (1.0 - p) ** gamma * ce
    return jnp.mean(jnp.sum(focal, axis=1))


if __name__ == "__main__":
    key = jax.random.PRNGKey(0)
    k1, k2, k3, k4, k5, k6 = jax.random.split(key, 6)

    # Test 1: tiny batch, single tile (matches the module's toy usage).
    N1, C1 = 8, 10
    logits1 = jax.random.normal(k1, (N1, C1), dtype=jnp.float32)
    targets1 = jax.random.randint(k2, (N1,), 0, C1, dtype=jnp.int32)
    out1 = jax.block_until_ready(focal_loss(logits1, targets1))
    ref1 = focal_loss_ref(logits1, targets1)
    assert jnp.allclose(out1, ref1, atol=1e-5, rtol=1e-5), (out1, ref1)

    # Test 2: ragged batch + forced small tile -> multi-tile accumulation, un-padded
    # partial last block, and (on 2-TC chips) the clamped dummy tail tile.
    N2, C2 = 37, 10
    logits2 = jax.random.normal(k3, (N2, C2), dtype=jnp.float32)
    targets2 = jax.random.randint(k4, (N2,), 0, C2, dtype=jnp.int32)
    out2 = jax.block_until_ready(focal_loss(logits2, targets2, tile_n=8))
    ref2 = focal_loss_ref(logits2, targets2)
    assert jnp.allclose(out2, ref2, atol=1e-5, rtol=1e-5), (out2, ref2)

    # Test 3: odd class count, larger ragged batch, larger tile with a partial last block.
    N3, C3 = 300, 7
    logits3 = jax.random.normal(k5, (N3, C3), dtype=jnp.float32)
    targets3 = jax.random.randint(k6, (N3,), 0, C3, dtype=jnp.int32)
    out3 = jax.block_until_ready(focal_loss(logits3, targets3, tile_n=64))
    ref3 = focal_loss_ref(logits3, targets3)
    assert jnp.allclose(out3, ref3, atol=1e-5, rtol=1e-5), (out3, ref3)

    print("KERNEL_OK")
</pallas_src>

<mosaic_0001>
module attributes {stable_mosaic.version = 11 : i64} {
  func.func @kernel(%arg0: i32, %arg1: i32, %arg2: memref<8x10xf32, #tpu.memory_space<vmem>>, %arg3: memref<8x1xi32, #tpu.memory_space<vmem>>, %arg4: memref<1x128xf32, #tpu.memory_space<vmem>>, %arg5: memref<8x1xf32, #tpu.memory_space<vmem>>) attributes {dimension_semantics = [#tpu.dimension_semantics<parallel>, #tpu.dimension_semantics<arbitrary>], iteration_bounds = array<i64: 1, 1>, scalar_prefetch = 0 : i64, scratch_operands = 1 : i64, tpu.core_type = #tpu.core_type<tc>, window_params = [{transform_indices = @transform_0, window_bounds = array<i64: 8, 10>}, {transform_indices = @transform_1, window_bounds = array<i64: 8, 1>}, {transform_indices = @transform_2, window_bounds = array<i64: 1, 128>}]} {
    %c0_i32 = arith.constant 0 : i32
    %0 = arith.cmpi eq, %arg1, %c0_i32 : i32
    %1 = arith.extui %0 : i1 to i32
    %c0_i32_0 = arith.constant 0 : i32
    %2 = arith.cmpi ne, %1, %c0_i32_0 : i32
    scf.if %2 {
      %cst_17 = arith.constant 0.000000e+00 : f32
      %48 = vector.broadcast %cst_17 : f32 to vector<8x1xf32>
      %c0_18 = arith.constant 0 : index
      %c0_19 = arith.constant 0 : index
      %49 = vector.load %arg5[%c0_18, %c0_19] : memref<8x1xf32, #tpu.memory_space<vmem>>, vector<8x1xf32>
      tpu.vector_store %arg5[%c0_18, %c0_19], %48 {strides = array<i32>} : memref<8x1xf32, #tpu.memory_space<vmem>>, vector<8x1xf32>,
      %cst_20 = arith.constant 0.000000e+00 : f32
      %50 = vector.broadcast %cst_20 : f32 to vector<1x128xf32>
      %c0_21 = arith.constant 0 : index
      %c0_22 = arith.constant 0 : index
      %51 = vector.load %arg4[%c0_21, %c0_22] : memref<1x128xf32, #tpu.memory_space<vmem>>, vector<1x128xf32>
      tpu.vector_store %arg4[%c0_21, %c0_22], %50 {strides = array<i32>} : memref<1x128xf32, #tpu.memory_space<vmem>>, vector<1x128xf32>,
    } else {
    }
    %c0 = arith.constant 0 : index
    %c0_1 = arith.constant 0 : index
    %3 = vector.load %arg2[%c0, %c0_1] : memref<8x10xf32, #tpu.memory_space<vmem>>, vector<8x10xf32>
    %c0_2 = arith.constant 0 : index
    %c0_3 = arith.constant 0 : index
    %4 = vector.load %arg3[%c0_2, %c0_3] : memref<8x1xi32, #tpu.memory_space<vmem>>, vector<8x1xi32>
    %cst = arith.constant dense<0xFF800000> : vector<8xf32>
    %5 = vector.multi_reduction <maximumf>, %3, %cst [1] : vector<8x10xf32> to vector<8xf32>
    %6 = vector.shape_cast %5 : vector<8xf32> to vector<8x1xf32>
    %7 = vector.broadcast %6 : vector<8x1xf32> to vector<8x10xf32>
    %8 = arith.subf %3, %7 : vector<8x10xf32>
    %9 = math.exp %8 : vector<8x10xf32>
    %cst_4 = arith.constant dense<0.000000e+00> : vector<8xf32>
    %10 = vector.multi_reduction <add>, %9, %cst_4 [1] : vector<8x10xf32> to vector<8xf32>
    %11 = vector.shape_cast %10 : vector<8xf32> to vector<8x1xf32>
    %12 = tpu.iota {dimensions = array<i32: 1>} : vector<8x10xi32>
    %13 = vector.broadcast %4 : vector<8x1xi32> to vector<8x10xi32>
    %14 = arith.cmpi eq, %12, %13 : vector<8x10xi32>
    %15 = arith.extui %14 : vector<8x10xi1> to vector<8x10xi32>
    %16 = arith.sitofp %15 : vector<8x10xi32> to vector<8x10xf32>
    %17 = arith.mulf %16, %3 : vector<8x10xf32>
    %cst_5 = arith.constant dense<0.000000e+00> : vector<8xf32>
    %18 = vector.multi_reduction <add>, %17, %cst_5 [1] : vector<8x10xf32> to vector<8xf32>
    %19 = vector.shape_cast %18 : vector<8xf32> to vector<8x1xf32>
    %20 = arith.subf %19, %6 : vector<8x1xf32>
    %21 = math.log %11 : vector<8x1xf32>
    %22 = arith.subf %20, %21 : vector<8x1xf32>
    %23 = math.exp %22 : vector<8x1xf32>
    %cst_6 = arith.constant 1.000000e+00 : f32
    %24 = vector.broadcast %cst_6 : f32 to vector<8x1xf32>
    %25 = arith.subf %24, %23 : vector<8x1xf32>
    %26 = arith.mulf %25, %25 : vector<8x1xf32>
    %cst_7 = arith.constant 2.500000e-01 : f32
    %27 = vector.broadcast %cst_7 : f32 to vector<8x1xf32>
    %28 = arith.mulf %27, %26 : vector<8x1xf32>
    %cst_8 = arith.constant 0.000000e+00 : f32
    %29 = vector.broadcast %cst_8 : f32 to vector<8x1xf32>
    %30 = arith.subf %29, %22 : vector<8x1xf32>
    %31 = arith.mulf %28, %30 : vector<8x1xf32>
    %c1_i32 = arith.constant 1 : i32
    %32 = arith.muli %arg0, %c1_i32 : i32
    %33 = arith.addi %32, %arg1 : i32
    %c8_i32 = arith.constant 8 : i32
    %34 = arith.muli %33, %c8_i32 : i32
    %35 = tpu.iota {dimensions = array<i32: 0>} : vector<8x1xi32>
    %36 = vector.broadcast %34 : i32 to vector<8x1xi32>
    %37 = arith.addi %36, %35 : vector<8x1xi32>
    %c8_i32_9 = arith.constant 8 : i32
    %38 = vector.broadcast %c8_i32_9 : i32 to vector<8x1xi32>
    %39 = arith.cmpi slt, %37, %38 : vector<8x1xi32>
    %cst_10 = arith.constant 0.000000e+00 : f32
    %40 = vector.broadcast %cst_10 : f32 to vector<8x1xf32>
    %41 = arith.select %39, %31, %40 : vector<8x1xi1>, vector<8x1xf32>
    %c0_11 = arith.constant 0 : index
    %c0_12 = arith.constant 0 : index
    %42 = vector.load %arg5[%c0_11, %c0_12] : memref<8x1xf32, #tpu.memory_space<vmem>>, vector<8x1xf32>
    %43 = arith.addf %42, %41 : vector<8x1xf32>
    %c0_13 = arith.constant 0 : index
    %c0_14 = arith.constant 0 : index
    %44 = vector.load %arg5[%c0_13, %c0_14] : memref<8x1xf32, #tpu.memory_space<vmem>>, vector<8x1xf32>
    tpu.vector_store %arg5[%c0_13, %c0_14], %43 {strides = array<i32>} : memref<8x1xf32, #tpu.memory_space<vmem>>, vector<8x1xf32>,
    %c0_i32_15 = arith.constant 0 : i32
    %45 = arith.cmpi eq, %arg1, %c0_i32_15 : i32
    %46 = arith.extui %45 : i1 to i32
    %c0_i32_16 = arith.constant 0 : i32
    %47 = arith.cmpi ne, %46, %c0_i32_16 : i32
    scf.if %47 {
      %cst_17 = arith.constant 0.000000e+00 : f32
      %48 = vector.broadcast %cst_17 : f32 to vector<1x128xf32>
      %c0_18 = arith.constant 0 : index
      %c0_19 = arith.constant 0 : index
      %49 = vector.load %arg5[%c0_18, %c0_19] : memref<8x1xf32, #tpu.memory_space<vmem>>, vector<8x1xf32>
      %50 = vector.shape_cast %49 : vector<8x1xf32> to vector<1x8x1xf32>
      %cst_20 = arith.constant dense<0.000000e+00> : vector<1xf32>
      %51 = vector.multi_reduction <add>, %50, %cst_20 [1, 2] : vector<1x8x1xf32> to vector<1xf32>
      %52 = vector.shape_cast %51 : vector<1xf32> to vector<1x1x1xf32>
      %53 = vector.extract %52[0, 0, 0] : f32 from vector<1x1x1xf32>
      %54 = vector.broadcast %53 : f32 to vector<1x128xf32>
      %55 = arith.addf %48, %54 : vector<1x128xf32>
      %c0_21 = arith.constant 0 : index
      %c0_22 = arith.constant 0 : index
      %56 = vector.load %arg4[%c0_21, %c0_22] : memref<1x128xf32, #tpu.memory_space<vmem>>, vector<1x128xf32>
      tpu.vector_store %arg4[%c0_21, %c0_22], %55 {strides = array<i32>} : memref<1x128xf32, #tpu.memory_space<vmem>>, vector<1x128xf32>,
    } else {
    }
    return
  }
  func.func @transform_0(%arg0: i32, %arg1: i32) -> (i32, i32) {
    %c1_i32 = arith.constant 1 : i32
    %0 = arith.muli %arg0, %c1_i32 : i32
    %1 = arith.addi %0, %arg1 : i32
    %c0_i32 = arith.constant 0 : i32
    %2 = arith.minsi %1, %c0_i32 : i32
    %c0_i32_0 = arith.constant 0 : i32
    %c0_i32_1 = arith.constant 0 : i32
    return %2, %c0_i32_0 : i32, i32
  }
  func.func @transform_1(%arg0: i32, %arg1: i32) -> (i32, i32) {
    %c1_i32 = arith.constant 1 : i32
    %0 = arith.muli %arg0, %c1_i32 : i32
    %1 = arith.addi %0, %arg1 : i32
    %c0_i32 = arith.constant 0 : i32
    %2 = arith.minsi %1, %c0_i32 : i32
    %c0_i32_0 = arith.constant 0 : i32
    %c0_i32_1 = arith.constant 0 : i32
    return %2, %c0_i32_0 : i32, i32
  }
  func.func @transform_2(%arg0: i32, %arg1: i32) -> (i32, i32) {
    %c0_i32 = arith.constant 0 : i32
    %c0_i32_0 = arith.constant 0 : i32
    return %c0_i32, %arg0 : i32, i32
  }
}

</mosaic_0001>

<llo_original>
// kernel: tpu_custom_call.1
$region0: #{tpu_custom_call.1}
  #allocation0 [shape = 'u32[]', space=smem, size = 0x4, offset = 0x4, fixed_abs, tag = 'smem constant byte address 0x4 - core index']
  #allocation1 [shape = 'u32[144,128]{1,0:T(1,128)}', space=vmem, size = 0x12000, scoped, tag = 'internal scratch']
  #allocation2 [shape = 'f32[8,1]{1,0:T(8,128)}', space=vmem, size = 0x1000, scoped, tag = 'scratch operand']
  %s0 = inlined_call_operand.vmem [shape: f32[8,10], index: 0, kind: input, shape index: {}]
  %s1 = inlined_call_operand.vmem [shape: s32[8,1], index: 1, kind: input, shape index: {}]
  %s2 = inlined_call_operand.hbm [shape: f32[1,128], index: 2, kind: output, shape index: {}]
  %s3 = sld [smem:[#allocation0]]
  $region26: #{tpu_custom_call.1} parent=0
    _
  %s5 = ssub.s32 1, %s3
  %s6 = scalar_select 0, %s5, %s3
  $region1: #{tpu_custom_call.1} parent=0
    #allocation3 [shape = 'u8[512]{0}', space=vmem, size = 0x400, scoped, tag = 'output window, operand 0, single buffered']
    #allocation4 [shape = 's32[1]{0}', space=sflag, size = 0x4, scoped, tag = 'scoped memory for tpu_custom_call.1']
    %7 = vsyncpa [#allocation4], 0
    // Predicated region
    $region2: #{tpu_custom_call.1} parent=1 // pred_check
      _
    $region3: #{tpu_custom_call.1} parent=1 // pred_check_branch
      %9 = sbr.rel (0) target = $region5
    $region4: #{tpu_custom_call.1} parent=1 // pred_region
      %s10 = sadd.s32 0, 0
      %p11 = scmp.lt.s32.totalorder %s10, 0
      %s12 = scalar_select %p11, %s10, 0
      %p13 = scmp.lt.s32.totalorder %s12, 0
      %s14 = scalar_select %p13, %s12, 0
      %s15 = smul.addr %s14, 8
      %s16 = scalar_lea.vmem %s0, %s15
      %s17 = sadd.s32 0, 0
      %p18 = scmp.lt.s32.totalorder %s17, 0
      %s19 = scalar_select %p18, %s17, 0
    $region5: #{tpu_custom_call.1} parent=1 // pred_fallthru
      _
    // Predicated region
    $region6: #{tpu_custom_call.1} parent=1 // pred_check
      _
    $region7: #{tpu_custom_call.1} parent=1 // pred_check_branch
      %21 = sbr.rel (0) target = $region9
    $region8: #{tpu_custom_call.1} parent=1 // pred_region
      %s22 = sadd.s32 0, 0
      %p23 = scmp.lt.s32.totalorder %s22, 0
      %s24 = scalar_select %p23, %s22, 0
      %p25 = scmp.lt.s32.totalorder %s24, 0
      %s26 = scalar_select %p25, %s24, 0
      %s27 = smul.addr %s26, 8
      %s28 = scalar_lea.vmem %s1, %s27
      %s29 = sadd.s32 0, 0
      %p30 = scmp.lt.s32.totalorder %s29, 0
      %s31 = scalar_select %p30, %s29, 0
    $region9: #{tpu_custom_call.1} parent=1 // pred_fallthru
      _
    %s32 = sadd.s32 0, 0
    %p33 = scmp.lt.s32.totalorder %s32, 0
    %s34 = scalar_select %p33, %s32, 0
    %p35 = scmp.lt.s32.totalorder %s34, 0
    %s36 = scalar_select %p35, %s34, 0
    %s37 = smul.addr %s36, 8
    %s38 = scalar_lea.vmem %s0, %s37
    %s39 = sadd.s32 0, 0
    %p40 = scmp.lt.s32.totalorder %s39, 0
    %s41 = scalar_select %p40, %s39, 0
    %p42 = scmp.lt.s32.totalorder %s41, 0
    %s43 = scalar_select %p42, %s41, 0
    %s44 = smul.addr %s43, 8
    %s45 = scalar_lea.vmem %s1, %s44
    %s46 = sadd.s32 0, 0
    %p47 = scmp.lt.s32.totalorder %s46, 0
    %s48 = scalar_select %p47, %s46, 0
    %p49 = scmp.lt.s32.totalorder %s48, 0
    %s50 = scalar_select %p49, %s48, 0
    %s51 = smul.addr %s50, 8
    %s52 = scalar_lea.vmem %s0, %s51
    %s53 = sadd.s32 0, 0
    %p54 = scmp.lt.s32.totalorder %s53, 0
    %s55 = scalar_select %p54, %s53, 0
    %s56 = sadd.s32 0, 0
    %p57 = scmp.lt.s32.totalorder %s56, 0
    %s58 = scalar_select %p57, %s56, 0
    %p59 = scmp.lt.s32.totalorder %s58, 0
    %s60 = scalar_select %p59, %s58, 0
    %s61 = smul.addr %s60, 8
    %s62 = scalar_lea.vmem %s1, %s61
    %s63 = sadd.s32 0, 0
    %p64 = scmp.lt.s32.totalorder %s63, 0
    %s65 = scalar_select %p64, %s63, 0
    %p66 = scmp.eq.s32.totalorder 0, 0
    // Predicated region
    $region10: #{tpu_custom_call.1} parent=1 // pred_check
      %p67 = pneg %p66
    $region11: #{tpu_custom_call.1} parent=1 // pred_check_branch
      %69 = sbr.rel (%p67) target = $region13
    $region12: #{tpu_custom_call.1} parent=1 // pred_region
      %vm70 = vcmask 7168
      %71 = vst.msk [vmem:[#allocation2] sm:$0xff] %vm70, 0.0
      %72 = vst [vmem:[#allocation3] sm:$0x1] 0.0
    $region13: #{tpu_custom_call.1} parent=1 // pred_fallthru
      _
    %v73 = vld [vmem:[%s52] sm:$0xff]
    %v74 = vld [vmem:[%s62] sm:$0xff]
    %vm75 = vcmask 80896
    %v76 = vsel %vm75, %v73, -inf
    %77 = vmax.xlane.f32.xlu0 %v76
    %v78 = vpop.xlane.xlu0 %77
    %v79 = vsub.f32 %v73, %v78
    %v80 = vmul.f32 %v79, 1.442695
    %v81 = vpow.pop %v80
    %v82 = vsel %vm75, %v81, 0.0
    %83 = vadd.xlane.f32.xlu0 %v82
    %v84 = vpop.xlane.xlu0 %83
    %v85 = vlaneseq
    %v86 = vand.u32 %v85, 127
    %87 = vset.pattern.permute.xlu0 0
    %88 = vperm.xlu0 %87, %v74
    %v89 = vpop.permute.xlu0 %88
    %vm90 = vcmp.eq.s32.totalorder %v86, %v89
    %v91 = vsel %vm90, 1, 0
    %v92 = vcvt.s32.f32 %v91
    %v93 = vmul.f32 %v92, %v73
    %v94 = vsel %vm75, %v93, 0.0
    %95 = vadd.xlane.f32.xlu0 %v94
    %v96 = vpop.xlane.xlu0 %95
    %v97 = vsub.f32 %v96, %v78
    %v98 = vlog2.pop %v84
    %v99 = vmul.f32 %v98, 0.6931472
    %v100 = vsub.f32 %v97, %v99
    %v101 = vmul.f32 %v100, 1.442695
    %v102 = vpow.pop %v101
    %v103 = vsub.f32 1.0, %v102
    %v104 = vmul.f32 %v103, %v103
    %v105 = vmul.f32 %v104, 0.25
    %v106 = vsub.f32 0.0, %v100
    %v107 = vmul.f32 %v105, %v106
    %s108 = sadd.s32 0, 0
    %s109 = smul.u32 %s108, 8
    %v110 = vlaneseq
    %v111 = vshrl.u32 %v110, 7
    %v112 = vstv %s109
    %v113 = vadd.s32 %v112, %v111
    %vm114 = vcmp.lt.s32.totalorder %v113, 8
    %v115 = vsel %vm114, %v107, 0.0
    %v116 = vld [vmem:[#allocation2] sm:$0xff]
    %v117 = vadd.f32 %v116, %v115
    %vm118 = vcmask 7168
    %119 = vst.msk [vmem:[#allocation2] sm:$0xff] %vm118, %v117
    // Predicated region
    $region14: #{tpu_custom_call.1} parent=1 // pred_check
      %p120 = pneg %p66
    $region15: #{tpu_custom_call.1} parent=1 // pred_check_branch
      %122 = sbr.rel (%p120) target = $region17
    $region16: #{tpu_custom_call.1} parent=1 // pred_region
      %v123 = vld [vmem:[#allocation2] sm:$0xff]
      %v124 = vsel %vm118, %v123, 0.0
      %125 = vadd.xlane.f32.xlu0 %v124
      %v126 = vpop.xlane.xlu0 %125
      %v127 = vrot.slane %v126, 4
      %v128 = vadd.f32 %v126, %v127
      %v129 = vrot.slane %v128, 2
      %v130 = vadd.f32 %v128, %v129
      %v131 = vrot.slane %v130, 1
      %v132 = vadd.f32 %v130, %v131
      %s133 = vtos %v132
      %v134 = vstv %s133
      %v135 = vadd.f32 %v134, 0.0
      %136 = vst [vmem:[#allocation3] sm:$0x1] %v135
    $region17: #{tpu_custom_call.1} parent=1 // pred_fallthru
      _
    // Predicated region
    $region18: #{tpu_custom_call.1} parent=1 // pred_check
      _
    $region19: #{tpu_custom_call.1} parent=1 // pred_check_branch
      %138 = sbr.rel (0) target = $region21
    $region20: #{tpu_custom_call.1} parent=1 // pred_region
      %s140 = ssub.s32 16, 16
      %141 = vsyncadd [#allocation4], %s140
      %s143 = sshll.u32 [#allocation3], 4
      %s144 = int_to_ptr.vmem [resolvable:$true] %s143
      %146 = dma.vmem_to_hbm [thread:$0]  %s144, 16, %s2, [#allocation4]
    $region21: #{tpu_custom_call.1} parent=1 // pred_fallthru
      _
    // Predicated region
    $region22: #{tpu_custom_call.1} parent=1 // pred_check
      _
    $region23: #{tpu_custom_call.1} parent=1 // pred_check_branch
      %148 = sbr.rel (0) target = $region25
    $region24: #{tpu_custom_call.1} parent=1 // pred_region
      %149 = dma.done [#allocation4], 16
    $region25: #{tpu_custom_call.1} parent=1 // pred_fallthru
      _
    %150 = vsyncpa [#allocation4], 1

</llo_original>
